<compile_context>
chip_gen: v7x
topology: tpu7x:2x2x1
jax: 0.10.0
libtpu: 0.0.40
codegen_flags: <defaults>
</compile_context>

<pallas_src>
import jax
import jax.numpy as jnp
from jax.experimental import pallas as pl
from jax.experimental.pallas import tpu as pltpu
from math import sqrt


def _dnn_click_kernel(cand_ref, user_ref, w1_ref, b1_ref, w2_ref, b2_ref,
                      out_ref, x_scr):
    X = cand_ref.shape[1]
    # Implicit concat: stage both halves into one (TB, 2X) scratch so layer 1
    # is a single MXU dot with K = 2X (bit-identical to cat(c, u) @ W1).
    x_scr[:, :X] = cand_ref[...]
    x_scr[:, X:] = user_ref[...]

    h = jnp.dot(x_scr[...], w1_ref[...],
                preferred_element_type=jnp.float32) + b1_ref[...]
    h = jnp.maximum(h, 0.0)                                   # ReLU

    # Layer 2: (TB, H) * (1, H) -> lane reduce -> (TB, 1); + SMEM scalar bias.
    y = jnp.sum(h * w2_ref[...], axis=-1, keepdims=True) + b2_ref[0]
    out_ref[...] = y


def _round_up(n, m):
    return ((n + m - 1) // m) * m


def dnn_click_predictor(candidate_news_vector, user_vector, params, *,
                        block_b=1024):
    """Pallas forward.  Inputs: (B, X) each.  Returns: (B,) float32."""
    w1, b1, w2_row, b2 = params
    B, X = candidate_news_vector.shape
    H = w1.shape[1]

    TB = min(block_b, _round_up(B, 8))            # batch tile (multiple of 8)
    grid = (pl.cdiv(B, TB),)

    out = pl.pallas_call(
        _dnn_click_kernel,
        out_shape=jax.ShapeDtypeStruct((B, 1), jnp.float32),
        grid=grid,
        in_specs=[
            pl.BlockSpec((TB, X), lambda i: (i, 0)),            # candidate tile
            pl.BlockSpec((TB, X), lambda i: (i, 0)),            # user tile
            pl.BlockSpec((2 * X, H), lambda i: (0, 0)),         # W1 (resident)
            pl.BlockSpec((1, H), lambda i: (0, 0)),             # b1 (resident)
            pl.BlockSpec((1, H), lambda i: (0, 0)),             # W2 row (resident)
            pl.BlockSpec(memory_space=pltpu.MemorySpace.SMEM),  # b2 scalar
        ],
        out_specs=pl.BlockSpec((TB, 1), lambda i: (i, 0)),
        scratch_shapes=[pltpu.VMEM((TB, 2 * X), jnp.float32)],
        compiler_params=pltpu.CompilerParams(
            dimension_semantics=("parallel",)),
    )(candidate_news_vector, user_vector, w1, b1, w2_row, b2)

    # TODO(synk): second-order wins intentionally left out: bf16 input cast
    # (changes numerics vs the f32 PyTorch reference) and a lane-dense
    # (batch-on-lanes) output layout (writes are ~4 B/row vs ~256 B/row reads,
    # so the store path is not the limiter here).
    return out[:, 0]                              # squeeze(dim=1) -> (B,)


def init_params(key, input_size, hidden_size=None):
    """nn.Linear-style init (U[-1/sqrt(fan_in), +]); weights stored (in, out)."""
    if hidden_size is None:
        hidden_size = int(sqrt(input_size))
    k1, k2, k3, k4 = jax.random.split(key, 4)

    bound1 = 1.0 / sqrt(input_size)
    w1 = jax.random.uniform(k1, (input_size, hidden_size), jnp.float32,
                            -bound1, bound1)
    b1 = jax.random.uniform(k2, (1, hidden_size), jnp.float32, -bound1, bound1)

    bound2 = 1.0 / sqrt(hidden_size)
    w2_row = jax.random.uniform(k3, (1, hidden_size), jnp.float32,
                                -bound2, bound2)   # layer-2 weight as a row
    b2 = jax.random.uniform(k4, (1,), jnp.float32, -bound2, bound2)

    return (w1, b1, w2_row, b2), hidden_size


def _reference(cand, user, params):
    """Pure-JAX reference (matches the PyTorch module)."""
    w1, b1, w2_row, b2 = params
    x = jnp.concatenate([cand, user], axis=1)
    h = jnp.maximum(x @ w1 + b1, 0.0)
    return h @ w2_row[0] + b2[0]


if __name__ == "__main__":
    key = jax.random.PRNGKey(0)
    k_params, k_cand, k_user = jax.random.split(key, 3)

    # Small shapes consistent with the module: X=32 -> input_size=64, H=8.
    B, X = 2, 32
    input_size = 2 * X
    params, H = init_params(k_params, input_size)

    cand = jax.random.normal(k_cand, (B, X), jnp.float32)
    user = jax.random.normal(k_user, (B, X), jnp.float32)

    out = jax.block_until_ready(dnn_click_predictor(cand, user, params))
    ref = _reference(cand, user, params)
    assert out.shape == (B,), out.shape
    assert jnp.allclose(out, ref, atol=1e-5, rtol=1e-5), (out, ref)

    # Exercise the gridded / pipelined path (multiple tiles + a partial tile).
    B2 = 300
    cand2 = jax.random.normal(jax.random.PRNGKey(1), (B2, X), jnp.float32)
    user2 = jax.random.normal(jax.random.PRNGKey(2), (B2, X), jnp.float32)
    out2 = jax.block_until_ready(
        dnn_click_predictor(cand2, user2, params, block_b=128))
    ref2 = _reference(cand2, user2, params)
    assert out2.shape == (B2,), out2.shape
    assert jnp.allclose(out2, ref2, atol=1e-5, rtol=1e-5)

    print("KERNEL_OK")
</pallas_src>

<mosaic_0001>
module attributes {stable_mosaic.version = 11 : i64} {
  func.func @_dnn_click_kernel(%arg0: i32, %arg1: memref<8x32xf32, #tpu.memory_space<vmem>>, %arg2: memref<8x32xf32, #tpu.memory_space<vmem>>, %arg3: memref<64x8xf32, #tpu.memory_space<vmem>>, %arg4: memref<1x8xf32, #tpu.memory_space<vmem>>, %arg5: memref<1x8xf32, #tpu.memory_space<vmem>>, %arg6: memref<1xf32, #tpu.memory_space<smem>>, %arg7: memref<8x1xf32, #tpu.memory_space<vmem>>, %arg8: memref<8x64xf32, #tpu.memory_space<vmem>>) attributes {dimension_semantics = [#tpu.dimension_semantics<parallel>], iteration_bounds = array<i64: 1>, scalar_prefetch = 0 : i64, scratch_operands = 1 : i64, tpu.core_type = #tpu.core_type<tc>, window_params = [{transform_indices = @transform_0, window_bounds = array<i64: 8, 32>}, {transform_indices = @transform_1, window_bounds = array<i64: 8, 32>}, {pipeline_mode = #tpu.pipeline_mode<synchronous>, transform_indices = @transform_2, window_bounds = array<i64: 64, 8>}, {pipeline_mode = #tpu.pipeline_mode<synchronous>, transform_indices = @transform_3, window_bounds = array<i64: 1, 8>}, {pipeline_mode = #tpu.pipeline_mode<synchronous>, transform_indices = @transform_4, window_bounds = array<i64: 1, 8>}, {transform_indices = @transform_5, window_bounds = array<i64: 1>}, {transform_indices = @transform_6, window_bounds = array<i64: 8, 1>}]} {
    %c0 = arith.constant 0 : index
    %c0_0 = arith.constant 0 : index
    %0 = vector.load %arg1[%c0, %c0_0] : memref<8x32xf32, #tpu.memory_space<vmem>>, vector<8x32xf32>
    %c0_1 = arith.constant 0 : index
    %c0_2 = arith.constant 0 : index
    %1 = vector.load %arg8[%c0_1, %c0_2] : memref<8x64xf32, #tpu.memory_space<vmem>>, vector<8x32xf32>
    tpu.vector_store %arg8[%c0_1, %c0_2], %0 {strides = array<i32>} : memref<8x64xf32, #tpu.memory_space<vmem>>, vector<8x32xf32>,
    %c0_3 = arith.constant 0 : index
    %c0_4 = arith.constant 0 : index
    %2 = vector.load %arg2[%c0_3, %c0_4] : memref<8x32xf32, #tpu.memory_space<vmem>>, vector<8x32xf32>
    %c0_5 = arith.constant 0 : index
    %c32 = arith.constant 32 : index
    %3 = vector.load %arg8[%c0_5, %c32] : memref<8x64xf32, #tpu.memory_space<vmem>>, vector<8x32xf32>
    tpu.vector_store %arg8[%c0_5, %c32], %2 {strides = array<i32>} : memref<8x64xf32, #tpu.memory_space<vmem>>, vector<8x32xf32>,
    %c0_6 = arith.constant 0 : index
    %c0_7 = arith.constant 0 : index
    %4 = vector.load %arg8[%c0_6, %c0_7] : memref<8x64xf32, #tpu.memory_space<vmem>>, vector<8x64xf32>
    %c0_8 = arith.constant 0 : index
    %c0_9 = arith.constant 0 : index
    %5 = vector.load %arg3[%c0_8, %c0_9] : memref<64x8xf32, #tpu.memory_space<vmem>>, vector<64x8xf32>
    %cst = arith.constant dense<0.000000e+00> : vector<8x8xf32>
    %6 = tpu.matmul %4, %5, %cst {dimension_numbers = #tpu.dot_dimension_numbers<[1], [0], [0], [1], [0, 0, 1, 1], [], []>} : vector<8x64xf32>, vector<64x8xf32>, vector<8x8xf32> -> vector<8x8xf32>
    %c0_10 = arith.constant 0 : index
    %c0_11 = arith.constant 0 : index
    %7 = vector.load %arg4[%c0_10, %c0_11] : memref<1x8xf32, #tpu.memory_space<vmem>>, vector<1x8xf32>
    %8 = vector.broadcast %7 : vector<1x8xf32> to vector<8x8xf32>
    %9 = arith.addf %6, %8 : vector<8x8xf32>
    %cst_12 = arith.constant 0.000000e+00 : f32
    %10 = vector.broadcast %cst_12 : f32 to vector<8x8xf32>
    %11 = arith.maximumf %9, %10 : vector<8x8xf32>
    %c0_13 = arith.constant 0 : index
    %c0_14 = arith.constant 0 : index
    %12 = vector.load %arg5[%c0_13, %c0_14] : memref<1x8xf32, #tpu.memory_space<vmem>>, vector<1x8xf32>
    %13 = vector.broadcast %12 : vector<1x8xf32> to vector<8x8xf32>
    %14 = arith.mulf %11, %13 : vector<8x8xf32>
    %cst_15 = arith.constant dense<0.000000e+00> : vector<8xf32>
    %15 = vector.multi_reduction <add>, %14, %cst_15 [1] : vector<8x8xf32> to vector<8xf32>
    %16 = vector.shape_cast %15 : vector<8xf32> to vector<8x1xf32>
    %c0_16 = arith.constant 0 : index
    %17 = memref.load %arg6[%c0_16] : memref<1xf32, #tpu.memory_space<smem>>
    %18 = vector.broadcast %17 : f32 to vector<8x1xf32>
    %19 = arith.addf %16, %18 : vector<8x1xf32>
    %c0_17 = arith.constant 0 : index
    %c0_18 = arith.constant 0 : index
    %20 = vector.load %arg7[%c0_17, %c0_18] : memref<8x1xf32, #tpu.memory_space<vmem>>, vector<8x1xf32>
    tpu.vector_store %arg7[%c0_17, %c0_18], %19 {strides = array<i32>} : memref<8x1xf32, #tpu.memory_space<vmem>>, vector<8x1xf32>,
    return
  }
  func.func @transform_0(%arg0: i32) -> (i32, i32) {
    %c0_i32 = arith.constant 0 : i32
    %c0_i32_0 = arith.constant 0 : i32
    return %arg0, %c0_i32 : i32, i32
  }
  func.func @transform_1(%arg0: i32) -> (i32, i32) {
    %c0_i32 = arith.constant 0 : i32
    %c0_i32_0 = arith.constant 0 : i32
    return %arg0, %c0_i32 : i32, i32
  }
  func.func @transform_2(%arg0: i32) -> (i32, i32) {
    %c0_i32 = arith.constant 0 : i32
    %c0_i32_0 = arith.constant 0 : i32
    %c0_i32_1 = arith.constant 0 : i32
    return %c0_i32, %c0_i32_0 : i32, i32
  }
  func.func @transform_3(%arg0: i32) -> (i32, i32) {
    %c0_i32 = arith.constant 0 : i32
    %c0_i32_0 = arith.constant 0 : i32
    %c0_i32_1 = arith.constant 0 : i32
    return %c0_i32, %c0_i32_0 : i32, i32
  }
  func.func @transform_4(%arg0: i32) -> (i32, i32) {
    %c0_i32 = arith.constant 0 : i32
    %c0_i32_0 = arith.constant 0 : i32
    %c0_i32_1 = arith.constant 0 : i32
    return %c0_i32, %c0_i32_0 : i32, i32
  }
  func.func @transform_5(%arg0: i32) -> i32 {
    %c0_i32 = arith.constant 0 : i32
    %c0_i32_0 = arith.constant 0 : i32
    return %c0_i32 : i32
  }
  func.func @transform_6(%arg0: i32) -> (i32, i32) {
    %c0_i32 = arith.constant 0 : i32
    %c0_i32_0 = arith.constant 0 : i32
    return %arg0, %c0_i32 : i32, i32
  }
}

</mosaic_0001>

<llo_original>
// kernel: tpu_custom_call.1
$region0: #{tpu_custom_call.1}
  #allocation0 [shape = 'u32[]', space=smem, size = 0x4, offset = 0x4, fixed_abs, tag = 'smem constant byte address 0x4 - core index']
  #allocation1 [shape = 'u32[144,128]{1,0:T(1,128)}', space=vmem, size = 0x12000, scoped, tag = 'internal scratch']
  #allocation2 [shape = 'f32[8,64]{1,0:T(8,128)}', space=vmem, size = 0x1000, scoped, tag = 'scratch operand']
  #allocation3 [shape = 'f32[1]{0:T(128)S(6)}', space=smem, size = 0x200, scoped, tag = 'scoped memory for tpu_custom_call.1']
  %s0 = inlined_call_operand.vmem [shape: f32[2,32], index: 0, kind: input, shape index: {}]
  %s1 = inlined_call_operand.vmem [shape: f32[2,32], index: 1, kind: input, shape index: {}]
  %s2 = inlined_call_operand.vmem [shape: f32[64,8], index: 2, kind: input, shape index: {}]
  %s3 = inlined_call_operand.vmem [shape: f32[1,8], index: 3, kind: input, shape index: {}]
  %s4 = inlined_call_operand.vmem [shape: f32[1,8], index: 4, kind: input, shape index: {}]
  %s5 = inlined_call_operand.<no memory space> [shape: f32[1], index: 5, kind: input, shape index: {}]
  %s6 = inlined_call_operand.vmem [shape: f32[2,1], index: 6, kind: output, shape index: {}]
  %s7 = sld [smem:[#allocation0]]
  $region64: #{tpu_custom_call.1} parent=0
    _
  %s9 = ssub.s32 1, %s7
  %s10 = scalar_select 0, %s9, %s7
  %11 = sst [smem:[#allocation3]] %s5
  $region1: #{tpu_custom_call.1} parent=0
    #allocation4 [shape = 'u8[4096]{0}', space=vmem, size = 0x1000, scoped, tag = 'output window, operand 0, single buffered']
    // Predicated region
    $region2: #{tpu_custom_call.1} parent=1 // pred_check
      _
    $region3: #{tpu_custom_call.1} parent=1 // pred_check_branch
      %13 = sbr.rel (0) target = $region5
    $region4: #{tpu_custom_call.1} parent=1 // pred_region
      _
    $region5: #{tpu_custom_call.1} parent=1 // pred_fallthru
      _
    // Predicated region
    $region6: #{tpu_custom_call.1} parent=1 // pred_check
      _
    $region7: #{tpu_custom_call.1} parent=1 // pred_check_branch
      %15 = sbr.rel (0) target = $region9
    $region8: #{tpu_custom_call.1} parent=1 // pred_region
      _
    $region9: #{tpu_custom_call.1} parent=1 // pred_fallthru
      _
    // Predicated region
    $region10: #{tpu_custom_call.1} parent=1 // pred_check
      _
    $region11: #{tpu_custom_call.1} parent=1 // pred_check_branch
      %17 = sbr.rel (0) target = $region13
    $region12: #{tpu_custom_call.1} parent=1 // pred_region
      _
    $region13: #{tpu_custom_call.1} parent=1 // pred_fallthru
      _
    // Predicated region
    $region14: #{tpu_custom_call.1} parent=1 // pred_check
      _
    $region15: #{tpu_custom_call.1} parent=1 // pred_check_branch
      %19 = sbr.rel (0) target = $region17
    $region16: #{tpu_custom_call.1} parent=1 // pred_region
      _
    $region17: #{tpu_custom_call.1} parent=1 // pred_fallthru
      _
    // Predicated region
    $region18: #{tpu_custom_call.1} parent=1 // pred_check
      _
    $region19: #{tpu_custom_call.1} parent=1 // pred_check_branch
      %21 = sbr.rel (0) target = $region21
    $region20: #{tpu_custom_call.1} parent=1 // pred_region
      _
    $region21: #{tpu_custom_call.1} parent=1 // pred_fallthru
      _
    // Predicated region
    $region22: #{tpu_custom_call.1} parent=1 // pred_check
      _
    $region23: #{tpu_custom_call.1} parent=1 // pred_check_branch
      %23 = sbr.rel (0) target = $region25
    $region24: #{tpu_custom_call.1} parent=1 // pred_region
      _
    $region25: #{tpu_custom_call.1} parent=1 // pred_fallthru
      _
    %v24 = vld [vmem:[%s0] sm:$0xff]
    %vm25 = vcmask 261120
    %26 = vst.msk [vmem:[#allocation2] sm:$0xff] %vm25, %v24
    %v27 = vld [vmem:[%s1] sm:$0xff]
    %29 = vrot.lane.b32.xlu0 %v27, 32
    %v30 = vpop.permute.xlu0 %29
    %vm32 = vcmask 523520
    %33 = vst.msk [vmem:[#allocation2] sm:$0xff] %vm32, %v30
    %v34 = vld [vmem:[#allocation2] sm:$0xff]
    %v35 = vld [vmem:[%s2] sm:$0xff]
    %v36 = vld [vmem:[%s2 + $0x8] sm:$0xff]
    %v37 = vld [vmem:[%s2 + $0x10] sm:$0xff]
    %v38 = vld [vmem:[%s2 + $0x18] sm:$0xff]
    %v39 = vld [vmem:[%s2 + $0x20] sm:$0xff]
    %v40 = vld [vmem:[%s2 + $0x28] sm:$0xff]
    %v41 = vld [vmem:[%s2 + $0x30] sm:$0xff]
    %v42 = vld [vmem:[%s2 + $0x38] sm:$0xff]
    %v43 = vld [vmem:[%s3] sm:$0x1]
    %v45 = vlaneseq
    %v46 = vshrl.u32 %v45, 7
    %v47 = vsub.s32 0, %v46
    %v48 = vrot.slane %v43, %v47
    %vm50 = vcmask 523264
    %v52 = vsel %vm50, %v34, 0
    %54 = vmatprep.subr.mxu0 0.0
    %55 = vmatpush1.msra.mxu0 %v35
    %56 = vmatprep.subr.mxu0 0.0
    %57 = vmatpush1.msra.mxu0 %v36
    %58 = vmatprep.subr.mxu0 0.0
    %59 = vmatpush1.msra.mxu0 %v37
    %60 = vmatprep.subr.mxu0 0.0
    %61 = vmatpush1.msra.mxu0 %v38
    %62 = vmatprep.subr.mxu0 0.0
    %63 = vmatpush1.msra.mxu0 %v39
    %64 = vmatprep.subr.mxu0 0.0
    %65 = vmatpush1.msra.mxu0 %v40
    %66 = vmatprep.subr.mxu0 0.0
    %67 = vmatpush1.msra.mxu0 %v41
    %68 = vmatprep.subr.mxu0 0.0
    %69 = vmatpush1.msra.mxu0 %v42
    %70 = vmatprep.subr.mxu0 0.0
    %71 = vmatpush1.msra.mxu0 0.0
    %72 = vmatprep.subr.mxu0 0.0
    %73 = vmatpush1.msra.mxu0 0.0
    %74 = vmatprep.subr.mxu0 0.0
    %75 = vmatpush1.msra.mxu0 0.0
    %76 = vmatprep.subr.mxu0 0.0
    %77 = vmatpush1.msra.mxu0 0.0
    %78 = vmatprep.subr.mxu0 0.0
    %79 = vmatpush1.msra.mxu0 0.0
    %80 = vmatprep.subr.mxu0 0.0
    %81 = vmatpush1.msra.mxu0 0.0
    %82 = vmatprep.subr.mxu0 0.0
    %83 = vmatpush1.msra.mxu0 0.0
    %84 = vmatprep.subr.mxu0 0.0
    %85 = vmatpush1.msra.mxu0 0.0
    %86 = vmatprep.subr.mxu0 0.0
    %87 = vmatpush1.msra.mxu0 0.0
    %88 = vmatprep.subr.mxu0 0.0
    %89 = vmatpush1.msra.mxu0 0.0
    %90 = vmatprep.subr.mxu0 0.0
    %91 = vmatpush1.msra.mxu0 0.0
    %92 = vmatprep.subr.mxu0 0.0
    %93 = vmatpush1.msra.mxu0 0.0
    %94 = vmatprep.subr.mxu0 0.0
    %95 = vmatpush1.msra.mxu0 0.0
    %96 = vmatprep.subr.mxu0 0.0
    %97 = vmatpush1.msra.mxu0 0.0
    %98 = vmatprep.subr.mxu0 0.0
    %99 = vmatpush1.msra.mxu0 0.0
    %100 = vmatprep.subr.mxu0 0.0
    %101 = vmatpush1.msra.mxu0 0.0
    %102 = vmatprep.subr.mxu0 0.0
    %103 = vmatpush1.msra.mxu0 0.0
    %104 = vmatprep.subr.mxu0 0.0
    %105 = vmatpush1.msra.mxu0 0.0
    %106 = vmatprep.subr.mxu0 0.0
    %107 = vmatpush1.msra.mxu0 0.0
    %108 = vmatprep.subr.mxu0 0.0
    %109 = vmatpush1.msra.mxu0 0.0
    %110 = vmatprep.subr.mxu0 0.0
    %111 = vmatpush1.msra.mxu0 0.0
    %112 = vmatprep.subr.mxu0 0.0
    %113 = vmatpush1.msra.mxu0 0.0
    %114 = vmatprep.subr.mxu0 0.0
    %115 = vmatpush1.msra.mxu0 0.0
    %116 = vmatprep.subr.mxu0 0.0
    %117 = vmatpush1.msra.mxu0 0.0
    %118 = vmatprep.mubr.f32.mxu0 0.0
    %119 = vmatmul.mubr.f32.gmra.mrb[0].mxu0 %v52
    %v120 = vpop.f32.mrb[0].mxu0
    %v121 = vadd.f32 %v48, %v120
    %v122 = vpop.f32.mrb[0].mxu0
    %123 = vdwg.mxu0
    %v124 = vmax.f32 %v121, 0.0
    %v125 = vld [vmem:[%s4] sm:$0x1]
    %v127 = vlaneseq
    %v128 = vshrl.u32 %v127, 7
    %v129 = vsub.s32 0, %v128
    %v130 = vrot.slane %v125, %v129
    %v132 = vmul.f32 %v124, %v130
    %vm133 = vcmask 64512
    %v134 = vsel %vm133, %v132, 0.0
    %135 = vadd.xlane.f32.xlu0 %v134
    %v136 = vpop.xlane.xlu0 %135
    %s137 = sld [smem:[#allocation3]]
    %v138 = vstv %s137
    %v139 = vadd.f32 %v136, %v138
    %vm140 = vcmask 7168
    %141 = vst.msk [vmem:[#allocation4] sm:$0xff] %vm140, %v139
    // Predicated region
    $region26: #{tpu_custom_call.1} parent=1 // pred_check
      _
    $region27: #{tpu_custom_call.1} parent=1 // pred_check_branch
      %143 = sbr.rel (0) target = $region29
    $region28: #{tpu_custom_call.1} parent=1 // pred_region
      // Predicated region
      $region30: #{tpu_custom_call.1} parent=28 // pred_check
        _
      $region31: #{tpu_custom_call.1} parent=28 // pred_check_branch
        %145 = sbr.rel (0) target = $region33
      $region32: #{tpu_custom_call.1} parent=28 // pred_region
        // Predicated region
        $region34: #{tpu_custom_call.1} parent=32 // pred_check
          _
        $region35: #{tpu_custom_call.1} parent=32 // pred_check_branch
          %147 = sbr.rel target = $region37
        $region36: #{tpu_custom_call.1} parent=32 // pred_region
          // Predicated region
          $region49: #{tpu_custom_call.1} parent=36 // pred_check
            _
          $region50: #{tpu_custom_call.1} parent=36 // pred_check_branch
            %162 = sbr.rel (0) target = $region52
          $region51: #{tpu_custom_call.1} parent=36 // pred_region
            loop: start=0, step=1, limit=1
            $region53: #{tpu_custom_call.1} parent=51 // loop_pre_header
              _
            $region54: #{tpu_custom_call.1} parent=51 // loop_header
              %s165 = sphi 0, %s169
              %p166 = scmp.ge.s32.totalorder %s165, 1
              %s170 = sphi [#allocation4], [#allocation4]
              %s171 = sphi %s6, %s6
            $region55: #{tpu_custom_call.1} parent=51 // loop_header_branch
              %168 = sbr.rel (%p166) target = $region59
            $region56: #{tpu_custom_call.1} parent=51 // loop_body
              %v172 = vld [vmem:[%s170] sm:$0x3]
              %173 = vst [vmem:[%s171] sm:$0x3] %v172
            $region57: #{tpu_custom_call.1} parent=51 // loop_footer
              %s169 = sadd.s32 1, %s165
            $region58: #{tpu_custom_call.1} parent=51 // loop_footer_branch
              %164 = sbr.rel target = $region54
            $region59: #{tpu_custom_call.1} parent=51 // loop_exit
              _
          $region52: #{tpu_custom_call.1} parent=36 // pred_fallthru
            _
        $region37: #{tpu_custom_call.1} parent=32 // pred_fallthru
          _
        // Predicated region
        $region38: #{tpu_custom_call.1} parent=32 // pred_check
          _
        $region39: #{tpu_custom_call.1} parent=32 // pred_check_branch
          %149 = sbr.rel (0) target = $region41
        $region40: #{tpu_custom_call.1} parent=32 // pred_region
          loop: start=0, step=1, limit=1
          $region42: #{tpu_custom_call.1} parent=40 // loop_pre_header
            _
          $region43: #{tpu_custom_call.1} parent=40 // loop_header
            %s152 = sphi 0, %s156
            %p153 = scmp.ge.s32.totalorder %s152, 1
            %s157 = sphi [#allocation4], [#allocation4]
            %s158 = sphi %s6, %s6
          $region44: #{tpu_custom_call.1} parent=40 // loop_header_branch
            %155 = sbr.rel (%p153) target = $region48
          $region45: #{tpu_custom_call.1} parent=40 // loop_body
            %v159 = vld [vmem:[%s157] sm:$0x3]
            %160 = vst [vmem:[%s158] sm:$0x3] %v159
          $region46: #{tpu_custom_call.1} parent=40 // loop_footer
            %s156 = sadd.s32 1, %s152
          $region47: #{tpu_custom_call.1} parent=40 // loop_footer_branch
            %151 = sbr.rel target = $region43
          $region48: #{tpu_custom_call.1} parent=40 // loop_exit
            _
        $region41: #{tpu_custom_call.1} parent=32 // pred_fallthru
          _
      $region33: #{tpu_custom_call.1} parent=28 // pred_fallthru
        _
      %174 = vnop
    $region29: #{tpu_custom_call.1} parent=1 // pred_fallthru
      _
    // Predicated region
    $region60: #{tpu_custom_call.1} parent=1 // pred_check
      _
    $region61: #{tpu_custom_call.1} parent=1 // pred_check_branch
      %176 = sbr.rel (0) target = $region63
    $region62: #{tpu_custom_call.1} parent=1 // pred_region
      _
    $region63: #{tpu_custom_call.1} parent=1 // pred_fallthru
      _

</llo_original>
